<compile_context>
chip_gen: v5e
topology: v5e:2x2
jax: 0.10.0
libtpu: 0.0.40
codegen_flags: <defaults>
</compile_context>

<pallas_src>
import jax
import jax.numpy as jnp
from jax.experimental import pallas as pl
from jax.experimental.pallas import tpu as pltpu


def _linear_relu_kernel(x_ref, w_ref, b_ref, o_ref):
    # x_ref: (TB, IN)   w_ref: (IN, OUT)   b_ref: (1, OUT) f32   o_ref: (TB, OUT)
    acc = jnp.dot(x_ref[...], w_ref[...], preferred_element_type=jnp.float32)
    acc = acc + b_ref[...]                       # bias broadcast, f32 epilogue
    o_ref[...] = jnp.maximum(acc, 0.0).astype(o_ref.dtype)


def _round_up(n, m):
    return ((n + m - 1) // m) * m


def _vmem_capacity_bytes():
    try:
        return int(pltpu.get_tpu_info().vmem_capacity_bytes)
    except Exception:
        return 64 * 1024 * 1024          # conservative fallback (v7x per-TC VMEM)


def linear_relu(x, w_t, b, *, block_b=4096, out_dtype=None):
    """Pallas forward: relu(x @ w_t + b).

    x:   (B, IN)    f32 or bf16
    w_t: (IN, OUT)  same dtype as x (nn.Linear weight, pre-transposed)
    b:   (OUT,)     f32 (cast to f32 internally regardless)

    No padding / slicing of the activation tensor: the batch is tiled with a
    "parallel" grid axis (partial last tile handled by Pallas masking — safe
    because each output row depends only on its own input row), and feature
    axes use full-extent blocks.  Accumulation and epilogue are f32; output is
    stored in `out_dtype` (default: x.dtype).
    """
    B, IN = x.shape
    IN2, OUT = w_t.shape
    assert IN == IN2 and b.shape == (OUT,)
    out_dtype = x.dtype if out_dtype is None else out_dtype

    x_isz = jnp.dtype(x.dtype).itemsize
    w_isz = jnp.dtype(w_t.dtype).itemsize
    o_isz = jnp.dtype(out_dtype).itemsize
    sublane = 16 if x_isz < 4 else 8     # bf16 packs 2 rows per sublane

    # --- batch tile from an explicit VMEM budget (v7x-safe) -----------------
    vmem_cap = _vmem_capacity_bytes()
    pipe_budget = (vmem_cap * 3) // 8            # ~24 MiB on v7x, ~48 MiB on v5e/v6e
    per_row = 2 * IN * x_isz + 2 * OUT * o_isz   # double-buffered x row + out row
    resident = 2 * (IN * OUT * w_isz) + 2 * (OUT * 4)  # W + bias (2 bufs each)
    avail = max(pipe_budget - resident, per_row * sublane)

    tb = avail // per_row
    tb = min(tb, block_b)
    tb = min(tb, _round_up(pl.cdiv(B, 2), sublane))   # >=2 tiles -> both TCs on v7x
    tb = max((tb // sublane) * sublane, sublane)
    if tb >= B:
        tb = B                                        # single full-extent block

    grid = (pl.cdiv(B, tb),)

    b2d = b.reshape(1, OUT).astype(jnp.float32)

    needed = 2 * tb * IN * x_isz + 2 * tb * OUT * o_isz + resident
    vmem_limit = int(min((vmem_cap * 3) // 4,
                         max(32 * 1024 * 1024, needed + 16 * 1024 * 1024)))

    return pl.pallas_call(
        _linear_relu_kernel,
        out_shape=jax.ShapeDtypeStruct((B, OUT), out_dtype),
        grid_spec=pltpu.PrefetchScalarGridSpec(
            num_scalar_prefetch=0,
            grid=grid,
            in_specs=[
                # x: tiled over batch, pipelined/double-buffered by Pallas.
                pl.BlockSpec((tb, IN), lambda i: (i, 0)),
                # W: constant index_map -> DMA'd once, resident across steps.
                pl.BlockSpec((IN, OUT), lambda i: (0, 0)),
                # bias: single resident (1, OUT) f32 block.
                pl.BlockSpec((1, OUT), lambda i: (0, 0)),
            ],
            out_specs=pl.BlockSpec((tb, OUT), lambda i: (i, 0)),
        ),
        compiler_params=pltpu.CompilerParams(
            # Batch tiles are independent -> parallel (2x across v7x's two TCs).
            dimension_semantics=("parallel",),
            vmem_limit_bytes=vmem_limit,
        ),
    )(x, w_t, b2d)


if __name__ == "__main__":
    key = jax.random.PRNGKey(0)

    # ---- Test 1: module-sized shapes (batch=8, hidden=32), f32, exact check ----
    kx, kw, kb = jax.random.split(key, 3)
    batch, hidden = 8, 32
    bound = 1.0 / (hidden ** 0.5)
    x = jax.random.normal(kx, (batch, hidden), dtype=jnp.float32)
    w = jax.random.uniform(kw, (hidden, hidden), jnp.float32, -bound, bound)  # (OUT, IN)
    b = jax.random.uniform(kb, (hidden,), jnp.float32, -bound, bound)

    out = jax.block_until_ready(linear_relu(x, w.T, b))
    ref = jnp.maximum(x @ w.T + b, 0.0)
    assert out.shape == (batch, hidden)
    assert out.dtype == jnp.float32
    assert jnp.allclose(out, ref, atol=1e-5, rtol=1e-5)

    # ---- Test 2: batch tiling + partial tail block + bf16 in/out MXU path ----
    kx2, kw2, kb2 = jax.random.split(jax.random.PRNGKey(1), 3)
    B2, IN2, OUT2 = 1000, 256, 256          # B2 not a multiple of the tile size
    bound2 = 1.0 / (IN2 ** 0.5)
    x2 = jax.random.normal(kx2, (B2, IN2), dtype=jnp.float32).astype(jnp.bfloat16)
    w2 = jax.random.uniform(kw2, (OUT2, IN2), jnp.float32, -bound2, bound2)
    w2_t = w2.T.astype(jnp.bfloat16)
    b2 = jax.random.uniform(kb2, (OUT2,), jnp.float32, -bound2, bound2)

    out2 = jax.block_until_ready(linear_relu(x2, w2_t, b2, block_b=2048))
    ref2 = jnp.maximum(
        jnp.dot(x2, w2_t, preferred_element_type=jnp.float32) + b2, 0.0
    ).astype(jnp.bfloat16)
    assert out2.shape == (B2, OUT2)
    assert out2.dtype == jnp.bfloat16
    assert jnp.allclose(out2.astype(jnp.float32), ref2.astype(jnp.float32),
                        atol=2e-2, rtol=2e-2)

    print("KERNEL_OK")
</pallas_src>

<mosaic_0001>
module attributes {stable_mosaic.version = 11 : i64} {
  func.func @_linear_relu_kernel(%arg0: i32, %arg1: memref<8x32xf32, #tpu.memory_space<vmem>>, %arg2: memref<32x32xf32, #tpu.memory_space<vmem>>, %arg3: memref<1x32xf32, #tpu.memory_space<vmem>>, %arg4: memref<8x32xf32, #tpu.memory_space<vmem>>) attributes {dimension_semantics = [#tpu.dimension_semantics<parallel>], iteration_bounds = array<i64: 1>, scalar_prefetch = 0 : i64, scratch_operands = 0 : i64, tpu.core_type = #tpu.core_type<tc>, window_params = [{transform_indices = @transform_0, window_bounds = array<i64: 8, 32>}, {pipeline_mode = #tpu.pipeline_mode<synchronous>, transform_indices = @transform_1, window_bounds = array<i64: 32, 32>}, {pipeline_mode = #tpu.pipeline_mode<synchronous>, transform_indices = @transform_2, window_bounds = array<i64: 1, 32>}, {transform_indices = @transform_3, window_bounds = array<i64: 8, 32>}]} {
    %c0 = arith.constant 0 : index
    %c0_0 = arith.constant 0 : index
    %0 = vector.load %arg1[%c0, %c0_0] : memref<8x32xf32, #tpu.memory_space<vmem>>, vector<8x32xf32>
    %c0_1 = arith.constant 0 : index
    %c0_2 = arith.constant 0 : index
    %1 = vector.load %arg2[%c0_1, %c0_2] : memref<32x32xf32, #tpu.memory_space<vmem>>, vector<32x32xf32>
    %cst = arith.constant dense<0.000000e+00> : vector<8x32xf32>
    %2 = tpu.matmul %0, %1, %cst {dimension_numbers = #tpu.dot_dimension_numbers<[1], [0], [0], [1], [0, 0, 1, 1], [], []>} : vector<8x32xf32>, vector<32x32xf32>, vector<8x32xf32> -> vector<8x32xf32>
    %c0_3 = arith.constant 0 : index
    %c0_4 = arith.constant 0 : index
    %3 = vector.load %arg3[%c0_3, %c0_4] : memref<1x32xf32, #tpu.memory_space<vmem>>, vector<1x32xf32>
    %4 = vector.broadcast %3 : vector<1x32xf32> to vector<8x32xf32>
    %5 = arith.addf %2, %4 : vector<8x32xf32>
    %cst_5 = arith.constant 0.000000e+00 : f32
    %6 = vector.broadcast %cst_5 : f32 to vector<8x32xf32>
    %7 = arith.maximumf %5, %6 : vector<8x32xf32>
    %c0_6 = arith.constant 0 : index
    %c0_7 = arith.constant 0 : index
    %8 = vector.load %arg4[%c0_6, %c0_7] : memref<8x32xf32, #tpu.memory_space<vmem>>, vector<8x32xf32>
    tpu.vector_store %arg4[%c0_6, %c0_7], %7 {strides = array<i32>} : memref<8x32xf32, #tpu.memory_space<vmem>>, vector<8x32xf32>,
    return
  }
  func.func @transform_0(%arg0: i32) -> (i32, i32) {
    %c0_i32 = arith.constant 0 : i32
    %c0_i32_0 = arith.constant 0 : i32
    return %arg0, %c0_i32 : i32, i32
  }
  func.func @transform_1(%arg0: i32) -> (i32, i32) {
    %c0_i32 = arith.constant 0 : i32
    %c0_i32_0 = arith.constant 0 : i32
    %c0_i32_1 = arith.constant 0 : i32
    return %c0_i32, %c0_i32_0 : i32, i32
  }
  func.func @transform_2(%arg0: i32) -> (i32, i32) {
    %c0_i32 = arith.constant 0 : i32
    %c0_i32_0 = arith.constant 0 : i32
    %c0_i32_1 = arith.constant 0 : i32
    return %c0_i32, %c0_i32_0 : i32, i32
  }
  func.func @transform_3(%arg0: i32) -> (i32, i32) {
    %c0_i32 = arith.constant 0 : i32
    %c0_i32_0 = arith.constant 0 : i32
    return %arg0, %c0_i32 : i32, i32
  }
}

</mosaic_0001>

<llo_original>
// kernel: tpu_custom_call.1
$region0: #{tpu_custom_call.1}
  #allocation0 [shape = 'u32[]', space=smem, size = 0x4, offset = 0x4, fixed_abs, tag = 'smem constant byte address 0x4 - core index']
  #allocation1 [shape = 'u32[72,128]{1,0:T(1,128)}', space=vmem, size = 0x9000, scoped, tag = 'internal scratch']
  %s0 = inlined_call_operand.hbm [shape: f32[8,32], index: 0, kind: input, shape index: {}]
  %s1 = inlined_call_operand.hbm [shape: f32[32,32], index: 1, kind: input, shape index: {}]
  %s2 = inlined_call_operand.vmem [shape: f32[1,32], index: 2, kind: input, shape index: {}]
  %s3 = inlined_call_operand.hbm [shape: f32[8,32], index: 3, kind: output, shape index: {}]
  %s4 = sld [smem:[#allocation0]]
  $region30: #{tpu_custom_call.1} parent=0
    _
  %s6 = ssub.s32 1, %s4
  %s7 = scalar_select 0, %s6, %s4
  $region1: #{tpu_custom_call.1} parent=0
    #allocation2 [shape = 'u8[4096]{0}', space=vmem, size = 0x1000, scoped, tag = 'input window, operand 0, single buffered']
    #allocation3 [shape = 's32[1]{0}', space=sflag, size = 0x4, scoped, tag = 'scoped memory for tpu_custom_call.1']
    #allocation4 [shape = 's32[1]{0}', space=sflag, size = 0x4, scoped, tag = 'scoped memory for tpu_custom_call.1']
    #allocation5 [shape = 'u8[16384]{0}', space=vmem, size = 0x4000, scoped, tag = 'input window, operand 1, single buffered']
    #allocation6 [shape = 's32[1]{0}', space=sflag, size = 0x4, scoped, tag = 'scoped memory for tpu_custom_call.1']
    #allocation7 [shape = 'u8[4096]{0}', space=vmem, size = 0x1000, scoped, tag = 'output window, operand 0, single buffered']
    %8 = vsyncpa [#allocation3], 0
    %9 = vsyncpa [#allocation6], 0
    %10 = vsyncpa [#allocation4], 0
    // Predicated region
    $region2: #{tpu_custom_call.1} parent=1 // pred_check
      _
    $region3: #{tpu_custom_call.1} parent=1 // pred_check_branch
      %12 = sbr.rel (0) target = $region5
    $region4: #{tpu_custom_call.1} parent=1 // pred_region
      %14 = vsyncadd [#allocation3], 0
      %s16 = sshll.u32 %s0, 4
      %s17 = int_to_ptr.hbm [resolvable:$true] %s16
      %s18 = sshll.u32 [#allocation2], 4
      %s19 = int_to_ptr.vmem [resolvable:$true] %s18
      %21 = dma.hbm_to_vmem [thread:$0]  %s17, 128, %s19, [#allocation3]
    $region5: #{tpu_custom_call.1} parent=1 // pred_fallthru
      _
    // Predicated region
    $region6: #{tpu_custom_call.1} parent=1 // pred_check
      _
    $region7: #{tpu_custom_call.1} parent=1 // pred_check_branch
      %23 = sbr.rel (0) target = $region9
    $region8: #{tpu_custom_call.1} parent=1 // pred_region
      %25 = vsyncadd [#allocation6], 0
      %s26 = sshll.u32 %s1, 4
      %s27 = int_to_ptr.hbm [resolvable:$true] %s26
      %s28 = sshll.u32 [#allocation5], 4
      %s29 = int_to_ptr.vmem [resolvable:$true] %s28
      %34 = dma.hbm_to_vmem [thread:$0]  %s27, 512, %s29, [#allocation6], 128, 128, 8
    $region9: #{tpu_custom_call.1} parent=1 // pred_fallthru
      _
    // Predicated region
    $region10: #{tpu_custom_call.1} parent=1 // pred_check
      _
    $region11: #{tpu_custom_call.1} parent=1 // pred_check_branch
      %36 = sbr.rel (0) target = $region13
    $region12: #{tpu_custom_call.1} parent=1 // pred_region
      _
    $region13: #{tpu_custom_call.1} parent=1 // pred_fallthru
      _
    // Predicated region
    $region14: #{tpu_custom_call.1} parent=1 // pred_check
      _
    $region15: #{tpu_custom_call.1} parent=1 // pred_check_branch
      %38 = sbr.rel (0) target = $region17
    $region16: #{tpu_custom_call.1} parent=1 // pred_region
      %40 = dma.done [#allocation3], 128
    $region17: #{tpu_custom_call.1} parent=1 // pred_fallthru
      _
    // Predicated region
    $region18: #{tpu_custom_call.1} parent=1 // pred_check
      _
    $region19: #{tpu_custom_call.1} parent=1 // pred_check_branch
      %42 = sbr.rel (0) target = $region21
    $region20: #{tpu_custom_call.1} parent=1 // pred_region
      %44 = dma.done [#allocation6], 512
    $region21: #{tpu_custom_call.1} parent=1 // pred_fallthru
      _
    %v45 = vld [vmem:[#allocation2] sm:$0xff]
    %v46 = vld [vmem:[#allocation5] sm:$0xff]
    %v47 = vld [vmem:[#allocation5 + $0x8] sm:$0xff]
    %v48 = vld [vmem:[#allocation5 + $0x10] sm:$0xff]
    %v49 = vld [vmem:[#allocation5 + $0x18] sm:$0xff]
    %v50 = vld [vmem:[%s2] sm:$0x1]
    %v52 = vperm.slane %v50, 0
    %vm54 = vcmask 261120
    %v56 = vsel %vm54, %v45, 0
    %58 = vmatpush.msra.mxu0 0.0
    %59 = vmatpush.msra.mxu0 0.0
    %60 = vmatpush.msra.mxu0 0.0
    %61 = vmatpush.msra.mxu0 0.0
    %62 = vmatpush.msra.mxu0 0.0
    %63 = vmatpush.msra.mxu0 0.0
    %64 = vmatpush.msra.mxu0 0.0
    %65 = vmatpush.msra.mxu0 0.0
    %66 = vmatpush.msra.mxu0 0.0
    %67 = vmatpush.msra.mxu0 0.0
    %68 = vmatpush.msra.mxu0 0.0
    %69 = vmatpush.msra.mxu0 0.0
    %70 = vmatpush.msra.mxu0 %v49
    %71 = vmatpush.msra.mxu0 %v48
    %72 = vmatpush.msra.mxu0 %v47
    %73 = vmatpush.msra.mxu0 %v46
    %74 = vmatmul.f32.gmra.mxu0 %v56
    %v75 = vpop.f32.mrf.mxu0
    %v76 = vadd.f32 %v52, %v75
    %77 = vdwg.mxu0
    %v78 = vmax.f32 %v76, 0.0
    %79 = vst.msk [vmem:[#allocation7] sm:$0xff] %vm54, %v78
    // Predicated region
    $region22: #{tpu_custom_call.1} parent=1 // pred_check
      _
    $region23: #{tpu_custom_call.1} parent=1 // pred_check_branch
      %81 = sbr.rel (0) target = $region25
    $region24: #{tpu_custom_call.1} parent=1 // pred_region
      %83 = vsyncadd [#allocation4], 0
      %s85 = sshll.u32 [#allocation7], 4
      %s86 = int_to_ptr.vmem [resolvable:$true] %s85
      %s87 = sshll.u32 %s3, 4
      %s88 = int_to_ptr.hbm [resolvable:$true] %s87
      %90 = dma.vmem_to_hbm [thread:$0]  %s86, 128, %s88, [#allocation4]
    $region25: #{tpu_custom_call.1} parent=1 // pred_fallthru
      _
    // Predicated region
    $region26: #{tpu_custom_call.1} parent=1 // pred_check
      _
    $region27: #{tpu_custom_call.1} parent=1 // pred_check_branch
      %92 = sbr.rel (0) target = $region29
    $region28: #{tpu_custom_call.1} parent=1 // pred_region
      %94 = dma.done [#allocation4], 128
    $region29: #{tpu_custom_call.1} parent=1 // pred_fallthru
      _
    %95 = vsyncpa [#allocation3], 1
    %96 = vsyncpa [#allocation6], 1
    %97 = vsyncpa [#allocation4], 1

</llo_original>
